<compile_context>
chip_gen: v7x
topology: tpu7x:2x2x1
jax: 0.10.0
libtpu: 0.0.40
codegen_flags: <defaults>
</compile_context>

<pallas_src>
import functools

import jax
import jax.numpy as jnp
from jax.experimental import pallas as pl
from jax.experimental.pallas import tpu as pltpu


def _round_up(x, m):
    return ((x + m - 1) // m) * m


def _make_actor_kernel(input_size, hidden_size, hidden_size2, output_size):
    # Row offsets of each layer inside the packed (sum_out, max_in) weight /
    # (sum_out, 1) bias slabs.  All offsets are multiples of 8 (sublane tile)
    # for these sizes, so the static slices below are layout-friendly.
    o0 = 0
    o1 = o0 + hidden_size
    o2 = o1 + hidden_size
    o3 = o2 + hidden_size2
    o4 = o3 + output_size

    def kernel(x_ref, wp_ref, bp_ref, o_ref):
        # x_ref:  (input_size, TILE_B)  -- batch on lanes (lane-dense)
        # wp_ref: (sum_out, max_in)     -- packed weights, PyTorch (out, in) layout
        # bp_ref: (sum_out, 1)          -- packed biases
        # o_ref:  (output_size, TILE_B) -- lane-dense output store
        x = x_ref[...]
        w = wp_ref[...]
        b = bp_ref[...]
        w1, b1 = w[o0:o1, :input_size], b[o0:o1]
        w2, b2 = w[o1:o2, :hidden_size], b[o1:o2]
        w3, b3 = w[o2:o3, :hidden_size], b[o2:o3]
        w4, b4 = w[o3:o4, :hidden_size2], b[o3:o4]

        h = jax.nn.sigmoid(jnp.dot(w1, x, preferred_element_type=jnp.float32) + b1)
        h = jax.nn.sigmoid(jnp.dot(w2, h, preferred_element_type=jnp.float32) + b2)
        h = jax.nn.sigmoid(jnp.dot(w3, h, preferred_element_type=jnp.float32) + b3)
        out = jnp.tanh(jnp.dot(w4, h, preferred_element_type=jnp.float32) + b4)
        o_ref[...] = out.astype(o_ref.dtype)

    return kernel


def actor_forward(state, w_packed, b_packed, *, dims, tile_b=1024):
    """state: (B, input_size) f32.  (w_packed, b_packed) from pack_actor_params().
    dims = (input_size, hidden_size, hidden_size2, output_size) -- static."""
    input_size, hidden_size, hidden_size2, output_size = dims
    B = state.shape[0]
    assert state.shape[1] == input_size

    # Batch-on-lanes layout; pad batch up to a multiple of the lane tile.
    # Default tile covers B in a single grid step (grid overhead dominates this
    # tiny kernel); very large batches stream through a pipelined 1-D grid.
    tb = min(_round_up(tile_b, 128), _round_up(B, 128))
    b_pad = _round_up(B, tb)
    x_t = state.T                                        # (input_size, B)
    if b_pad != B:
        x_t = jnp.pad(x_t, ((0, 0), (0, b_pad - B)))

    grid = (b_pad // tb,)
    kernel = _make_actor_kernel(input_size, hidden_size, hidden_size2, output_size)

    flops = 2 * b_pad * (input_size * hidden_size + hidden_size * hidden_size
                         + hidden_size * hidden_size2 + hidden_size2 * output_size)
    transcendentals = b_pad * (2 * hidden_size + hidden_size2 + output_size)
    bytes_accessed = 4 * b_pad * (input_size + output_size) \
        + 4 * (w_packed.size + b_packed.size)

    out_t = pl.pallas_call(
        kernel,
        out_shape=jax.ShapeDtypeStruct((output_size, b_pad), jnp.float32),
        grid=grid,
        in_specs=[
            # Streamed batch tile (double-buffered by the Pallas pipeline).
            pl.BlockSpec((input_size, tb), lambda i: (0, i)),
            # Weights / biases: constant block index -> VMEM-resident, DMA'd once.
            pl.BlockSpec(w_packed.shape, lambda i: (0, 0)),
            pl.BlockSpec(b_packed.shape, lambda i: (0, 0)),
        ],
        out_specs=pl.BlockSpec((output_size, tb), lambda i: (0, i)),
        compiler_params=pltpu.CompilerParams(
            dimension_semantics=("parallel",)),
        cost_estimate=pl.CostEstimate(
            flops=flops,
            transcendentals=transcendentals,
            bytes_accessed=bytes_accessed),
    )(x_t, w_packed, b_packed)

    return out_t[:, :B].T                                # back to (B, output_size)


def init_actor_params(key, input_size, hidden_size, hidden_size2, output_size):
    """nn.Linear-style init: w (out, in), b (out,), both U(-1/sqrt(fan_in), ...)."""
    shapes = [(input_size, hidden_size), (hidden_size, hidden_size),
              (hidden_size, hidden_size2), (hidden_size2, output_size)]
    layers = []
    for fan_in, fan_out in shapes:
        key, kw, kb = jax.random.split(key, 3)
        bound = 1.0 / jnp.sqrt(fan_in)
        w = jax.random.uniform(kw, (fan_out, fan_in), jnp.float32, -bound, bound)
        b = jax.random.uniform(kb, (fan_out,), jnp.float32, -bound, bound)
        layers.append((w, b))
    return layers


def pack_actor_params(layer_params):
    """Pack 4x (w, b) [w: (out, in), b: (out,)] into one weight slab and one
    bias slab so the kernel needs only two resident input DMAs."""
    max_in = max(w.shape[1] for (w, _) in layer_params)
    w_rows, b_rows = [], []
    for w, b in layer_params:
        w_rows.append(jnp.pad(w, ((0, 0), (0, max_in - w.shape[1]))))
        b_rows.append(b.reshape(-1, 1))
    w_packed = jnp.concatenate(w_rows, axis=0).astype(jnp.float32)   # (104, 32)
    b_packed = jnp.concatenate(b_rows, axis=0).astype(jnp.float32)   # (104, 1)
    return w_packed, b_packed


def actor_reference(state, layer_params):
    (w1, b1), (w2, b2), (w3, b3), (w4, b4) = layer_params
    x = jax.nn.sigmoid(state @ w1.T + b1)
    x = jax.nn.sigmoid(x @ w2.T + b2)
    x = jax.nn.sigmoid(x @ w3.T + b3)
    return jnp.tanh(x @ w4.T + b4)


if __name__ == "__main__":
    key = jax.random.PRNGKey(0)
    batch, input_size, hidden_size, hidden_size2, output_size = 500, 16, 32, 32, 8
    dims = (input_size, hidden_size, hidden_size2, output_size)

    key, kx = jax.random.split(key)
    state = jax.random.normal(kx, (batch, input_size), jnp.float32)
    layers = init_actor_params(key, *dims)
    w_packed, b_packed = pack_actor_params(layers)

    # Default tile -> batch padded to 512, single grid step (no per-step overhead).
    fwd = jax.jit(functools.partial(actor_forward, dims=dims))
    out = jax.block_until_ready(fwd(state, w_packed, b_packed))

    ref = actor_reference(state, layers)
    assert out.shape == (batch, output_size)
    assert jnp.allclose(out, ref, atol=1e-4, rtol=1e-4), "Pallas kernel mismatch vs reference"

    # Also exercise the multi-step pipelined path (tile 128 -> 4 grid steps).
    fwd_tiled = jax.jit(functools.partial(actor_forward, dims=dims, tile_b=128))
    out2 = jax.block_until_ready(fwd_tiled(state, w_packed, b_packed))
    assert jnp.allclose(out2, ref, atol=1e-4, rtol=1e-4), "Tiled Pallas kernel mismatch"

    print("KERNEL_OK")
</pallas_src>

<mosaic_0001>
module attributes {stable_mosaic.version = 11 : i64} {
  func.func @kernel(%arg0: i32, %arg1: memref<16x512xf32, #tpu.memory_space<vmem>>, %arg2: memref<104x32xf32, #tpu.memory_space<vmem>>, %arg3: memref<104x1xf32, #tpu.memory_space<vmem>>, %arg4: memref<8x512xf32, #tpu.memory_space<vmem>>) attributes {dimension_semantics = [#tpu.dimension_semantics<parallel>], iteration_bounds = array<i64: 1>, scalar_prefetch = 0 : i64, scratch_operands = 0 : i64, tpu.core_type = #tpu.core_type<tc>, window_params = [{transform_indices = @transform_0, window_bounds = array<i64: 16, 512>}, {pipeline_mode = #tpu.pipeline_mode<synchronous>, transform_indices = @transform_1, window_bounds = array<i64: 104, 32>}, {pipeline_mode = #tpu.pipeline_mode<synchronous>, transform_indices = @transform_2, window_bounds = array<i64: 104, 1>}, {transform_indices = @transform_3, window_bounds = array<i64: 8, 512>}]} {
    %c0 = arith.constant 0 : index
    %c0_0 = arith.constant 0 : index
    %0 = vector.load %arg1[%c0, %c0_0] : memref<16x512xf32, #tpu.memory_space<vmem>>, vector<16x512xf32>
    %c0_1 = arith.constant 0 : index
    %c0_2 = arith.constant 0 : index
    %1 = vector.load %arg2[%c0_1, %c0_2] : memref<104x32xf32, #tpu.memory_space<vmem>>, vector<104x32xf32>
    %c0_3 = arith.constant 0 : index
    %c0_4 = arith.constant 0 : index
    %2 = vector.load %arg3[%c0_3, %c0_4] : memref<104x1xf32, #tpu.memory_space<vmem>>, vector<104x1xf32>
    %3 = vector.extract_strided_slice %1 {offsets = [0, 0], sizes = [32, 16], strides = [1, 1]} : vector<104x32xf32> to vector<32x16xf32>
    %4 = vector.extract_strided_slice %2 {offsets = [0, 0], sizes = [32, 1], strides = [1, 1]} : vector<104x1xf32> to vector<32x1xf32>
    %5 = vector.extract_strided_slice %1 {offsets = [32, 0], sizes = [32, 32], strides = [1, 1]} : vector<104x32xf32> to vector<32x32xf32>
    %6 = vector.extract_strided_slice %2 {offsets = [32, 0], sizes = [32, 1], strides = [1, 1]} : vector<104x1xf32> to vector<32x1xf32>
    %7 = vector.extract_strided_slice %1 {offsets = [64, 0], sizes = [32, 32], strides = [1, 1]} : vector<104x32xf32> to vector<32x32xf32>
    %8 = vector.extract_strided_slice %2 {offsets = [64, 0], sizes = [32, 1], strides = [1, 1]} : vector<104x1xf32> to vector<32x1xf32>
    %9 = vector.extract_strided_slice %1 {offsets = [96, 0], sizes = [8, 32], strides = [1, 1]} : vector<104x32xf32> to vector<8x32xf32>
    %10 = vector.extract_strided_slice %2 {offsets = [96, 0], sizes = [8, 1], strides = [1, 1]} : vector<104x1xf32> to vector<8x1xf32>
    %cst = arith.constant dense<0.000000e+00> : vector<32x512xf32>
    %11 = tpu.matmul %3, %0, %cst {dimension_numbers = #tpu.dot_dimension_numbers<[1], [0], [0], [1], [0, 0, 1, 1], [], []>} : vector<32x16xf32>, vector<16x512xf32>, vector<32x512xf32> -> vector<32x512xf32>
    %12 = vector.broadcast %4 : vector<32x1xf32> to vector<32x512xf32>
    %13 = arith.addf %11, %12 : vector<32x512xf32>
    %14 = arith.negf %13 : vector<32x512xf32>
    %15 = math.exp %14 : vector<32x512xf32>
    %cst_5 = arith.constant 1.000000e+00 : f32
    %16 = vector.broadcast %cst_5 : f32 to vector<32x512xf32>
    %17 = arith.addf %16, %15 : vector<32x512xf32>
    %18 = arith.divf %16, %17 : vector<32x512xf32>
    %cst_6 = arith.constant dense<0.000000e+00> : vector<32x512xf32>
    %19 = tpu.matmul %5, %18, %cst_6 {dimension_numbers = #tpu.dot_dimension_numbers<[1], [0], [0], [1], [0, 0, 1, 1], [], []>} : vector<32x32xf32>, vector<32x512xf32>, vector<32x512xf32> -> vector<32x512xf32>
    %20 = vector.broadcast %6 : vector<32x1xf32> to vector<32x512xf32>
    %21 = arith.addf %19, %20 : vector<32x512xf32>
    %22 = arith.negf %21 : vector<32x512xf32>
    %23 = math.exp %22 : vector<32x512xf32>
    %cst_7 = arith.constant 1.000000e+00 : f32
    %24 = vector.broadcast %cst_7 : f32 to vector<32x512xf32>
    %25 = arith.addf %24, %23 : vector<32x512xf32>
    %26 = arith.divf %24, %25 : vector<32x512xf32>
    %cst_8 = arith.constant dense<0.000000e+00> : vector<32x512xf32>
    %27 = tpu.matmul %7, %26, %cst_8 {dimension_numbers = #tpu.dot_dimension_numbers<[1], [0], [0], [1], [0, 0, 1, 1], [], []>} : vector<32x32xf32>, vector<32x512xf32>, vector<32x512xf32> -> vector<32x512xf32>
    %28 = vector.broadcast %8 : vector<32x1xf32> to vector<32x512xf32>
    %29 = arith.addf %27, %28 : vector<32x512xf32>
    %30 = arith.negf %29 : vector<32x512xf32>
    %31 = math.exp %30 : vector<32x512xf32>
    %cst_9 = arith.constant 1.000000e+00 : f32
    %32 = vector.broadcast %cst_9 : f32 to vector<32x512xf32>
    %33 = arith.addf %32, %31 : vector<32x512xf32>
    %34 = arith.divf %32, %33 : vector<32x512xf32>
    %cst_10 = arith.constant dense<0.000000e+00> : vector<8x512xf32>
    %35 = tpu.matmul %9, %34, %cst_10 {dimension_numbers = #tpu.dot_dimension_numbers<[1], [0], [0], [1], [0, 0, 1, 1], [], []>} : vector<8x32xf32>, vector<32x512xf32>, vector<8x512xf32> -> vector<8x512xf32>
    %36 = vector.broadcast %10 : vector<8x1xf32> to vector<8x512xf32>
    %37 = arith.addf %35, %36 : vector<8x512xf32>
    %38 = math.tanh %37 : vector<8x512xf32>
    %c0_11 = arith.constant 0 : index
    %c0_12 = arith.constant 0 : index
    %39 = vector.load %arg4[%c0_11, %c0_12] : memref<8x512xf32, #tpu.memory_space<vmem>>, vector<8x512xf32>
    tpu.vector_store %arg4[%c0_11, %c0_12], %38 {strides = array<i32>} : memref<8x512xf32, #tpu.memory_space<vmem>>, vector<8x512xf32>,
    return
  }
  func.func @transform_0(%arg0: i32) -> (i32, i32) {
    %c0_i32 = arith.constant 0 : i32
    %c0_i32_0 = arith.constant 0 : i32
    return %c0_i32, %arg0 : i32, i32
  }
  func.func @transform_1(%arg0: i32) -> (i32, i32) {
    %c0_i32 = arith.constant 0 : i32
    %c0_i32_0 = arith.constant 0 : i32
    %c0_i32_1 = arith.constant 0 : i32
    return %c0_i32, %c0_i32_0 : i32, i32
  }
  func.func @transform_2(%arg0: i32) -> (i32, i32) {
    %c0_i32 = arith.constant 0 : i32
    %c0_i32_0 = arith.constant 0 : i32
    %c0_i32_1 = arith.constant 0 : i32
    return %c0_i32, %c0_i32_0 : i32, i32
  }
  func.func @transform_3(%arg0: i32) -> (i32, i32) {
    %c0_i32 = arith.constant 0 : i32
    %c0_i32_0 = arith.constant 0 : i32
    return %c0_i32, %arg0 : i32, i32
  }
}

</mosaic_0001>

<llo_original>
// kernel: actor_forward.1
$region0: #{actor_forward.1}
  #allocation0 [shape = 'u32[]', space=smem, size = 0x4, offset = 0x4, fixed_abs, tag = 'smem constant byte address 0x4 - core index']
  #allocation1 [shape = 'u32[144,128]{1,0:T(1,128)}', space=vmem, size = 0x12000, scoped, tag = 'internal scratch']
  %s0 = inlined_call_operand.vmem [shape: f32[16,512], index: 0, kind: input, shape index: {}]
  %s1 = inlined_call_operand.vmem [shape: f32[104,32], index: 1, kind: input, shape index: {}]
  %s2 = inlined_call_operand.vmem [shape: f32[104,1], index: 2, kind: input, shape index: {}]
  %s3 = inlined_call_operand.vmem [shape: f32[8,512], index: 3, kind: output, shape index: {}]
  %s4 = sld [smem:[#allocation0]]
  $region22: #{actor_forward.1} parent=0
    _
  %s6 = ssub.s32 1, %s4
  %s7 = scalar_select 0, %s6, %s4
  // Predicated region
  $region2: #{actor_forward.1} parent=0 // pred_check
    _
  $region3: #{actor_forward.1} parent=0 // pred_check_branch
    %9 = sbr.rel (0) target = $region5
  $region4: #{actor_forward.1} parent=0 // pred_region
    _
  $region5: #{actor_forward.1} parent=0 // pred_fallthru
    _
  // Predicated region
  $region6: #{actor_forward.1} parent=0 // pred_check
    _
  $region7: #{actor_forward.1} parent=0 // pred_check_branch
    %11 = sbr.rel (0) target = $region9
  $region8: #{actor_forward.1} parent=0 // pred_region
    _
  $region9: #{actor_forward.1} parent=0 // pred_fallthru
    _
  // Predicated region
  $region10: #{actor_forward.1} parent=0 // pred_check
    _
  $region11: #{actor_forward.1} parent=0 // pred_check_branch
    %13 = sbr.rel (0) target = $region13
  $region12: #{actor_forward.1} parent=0 // pred_region
    _
  $region13: #{actor_forward.1} parent=0 // pred_fallthru
    _
  %v14 = vld [vmem:[%s0] sm:$0xff]
  %v15 = vld [vmem:[%s0 + $0x8] sm:$0xff]
  %v16 = vld [vmem:[%s0 + $0x10] sm:$0xff]
  %v17 = vld [vmem:[%s0 + $0x18] sm:$0xff]
  %v18 = vld [vmem:[%s0 + $0x20] sm:$0xff]
  %v19 = vld [vmem:[%s0 + $0x28] sm:$0xff]
  %v20 = vld [vmem:[%s0 + $0x30] sm:$0xff]
  %v21 = vld [vmem:[%s0 + $0x38] sm:$0xff]
  %v22 = vld [vmem:[%s1] sm:$0xff]
  %v23 = vld [vmem:[%s1 + $0x8] sm:$0xff]
  %v24 = vld [vmem:[%s1 + $0x10] sm:$0xff]
  %v25 = vld [vmem:[%s1 + $0x18] sm:$0xff]
  %v26 = vld [vmem:[%s1 + $0x20] sm:$0xff]
  %v27 = vld [vmem:[%s1 + $0x28] sm:$0xff]
  %v28 = vld [vmem:[%s1 + $0x30] sm:$0xff]
  %v29 = vld [vmem:[%s1 + $0x38] sm:$0xff]
  %v30 = vld [vmem:[%s1 + $0x40] sm:$0xff]
  %v31 = vld [vmem:[%s1 + $0x48] sm:$0xff]
  %v32 = vld [vmem:[%s1 + $0x50] sm:$0xff]
  %v33 = vld [vmem:[%s1 + $0x58] sm:$0xff]
  %v34 = vld [vmem:[%s1 + $0x60] sm:$0xff]
  %v35 = vld [vmem:[%s2] sm:$0xff]
  %v36 = vld [vmem:[%s2 + $0x8] sm:$0xff]
  %v37 = vld [vmem:[%s2 + $0x10] sm:$0xff]
  %v38 = vld [vmem:[%s2 + $0x18] sm:$0xff]
  %v39 = vld [vmem:[%s2 + $0x20] sm:$0xff]
  %v40 = vld [vmem:[%s2 + $0x28] sm:$0xff]
  %v41 = vld [vmem:[%s2 + $0x30] sm:$0xff]
  %v42 = vld [vmem:[%s2 + $0x38] sm:$0xff]
  %v43 = vld [vmem:[%s2 + $0x40] sm:$0xff]
  %v44 = vld [vmem:[%s2 + $0x48] sm:$0xff]
  %v45 = vld [vmem:[%s2 + $0x50] sm:$0xff]
  %v46 = vld [vmem:[%s2 + $0x58] sm:$0xff]
  %v47 = vld [vmem:[%s2 + $0x60] sm:$0xff]
  %49 = vset.pattern.permute.xlu0 0
  %50 = vperm.xlu0 %49, %v35
  %v51 = vpop.permute.xlu0 %50
  %54 = vset.pattern.permute.xlu0 0
  %55 = vperm.xlu0 %54, %v36
  %v56 = vpop.permute.xlu0 %55
  %59 = vset.pattern.permute.xlu0 0
  %60 = vperm.xlu0 %59, %v37
  %v61 = vpop.permute.xlu0 %60
  %64 = vset.pattern.permute.xlu0 0
  %65 = vperm.xlu0 %64, %v38
  %v66 = vpop.permute.xlu0 %65
  %vm68 = vcmask 130048
  %v70 = vsel %vm68, %v22, 0
  %v73 = vsel %vm68, %v23, 0
  %v76 = vsel %vm68, %v24, 0
  %v79 = vsel %vm68, %v25, 0
  %81 = vmatprep.subr.mxu0 %v15
  %82 = vmatpush1.msra.mxu0 %v14
  %83 = vmatprep.subr.mxu0 %v19
  %84 = vmatpush1.msra.mxu0 %v18
  %85 = vmatprep.subr.mxu0 0.0
  %86 = vmatpush1.msra.mxu0 0.0
  %87 = vmatprep.subr.mxu0 0.0
  %88 = vmatpush1.msra.mxu0 0.0
  %89 = vmatprep.subr.mxu0 0.0
  %90 = vmatpush1.msra.mxu0 0.0
  %91 = vmatprep.subr.mxu0 0.0
  %92 = vmatpush1.msra.mxu0 0.0
  %93 = vmatprep.subr.mxu0 0.0
  %94 = vmatpush1.msra.mxu0 0.0
  %95 = vmatprep.subr.mxu0 0.0
  %96 = vmatpush1.msra.mxu0 0.0
  %97 = vmatprep.subr.mxu0 0.0
  %98 = vmatpush1.msra.mxu0 0.0
  %99 = vmatprep.subr.mxu0 0.0
  %100 = vmatpush1.msra.mxu0 0.0
  %101 = vmatprep.subr.mxu0 0.0
  %102 = vmatpush1.msra.mxu0 0.0
  %103 = vmatprep.subr.mxu0 0.0
  %104 = vmatpush1.msra.mxu0 0.0
  %105 = vmatprep.subr.mxu0 0.0
  %106 = vmatpush1.msra.mxu0 0.0
  %107 = vmatprep.subr.mxu0 0.0
  %108 = vmatpush1.msra.mxu0 0.0
  %109 = vmatprep.subr.mxu0 0.0
  %110 = vmatpush1.msra.mxu0 0.0
  %111 = vmatprep.subr.mxu0 0.0
  %112 = vmatpush1.msra.mxu0 0.0
  %113 = vmatprep.subr.mxu0 0.0
  %114 = vmatpush1.msra.mxu0 0.0
  %115 = vmatprep.subr.mxu0 0.0
  %116 = vmatpush1.msra.mxu0 0.0
  %117 = vmatprep.subr.mxu0 0.0
  %118 = vmatpush1.msra.mxu0 0.0
  %119 = vmatprep.subr.mxu0 0.0
  %120 = vmatpush1.msra.mxu0 0.0
  %121 = vmatprep.subr.mxu0 0.0
  %122 = vmatpush1.msra.mxu0 0.0
  %123 = vmatprep.subr.mxu0 0.0
  %124 = vmatpush1.msra.mxu0 0.0
  %125 = vmatprep.subr.mxu0 0.0
  %126 = vmatpush1.msra.mxu0 0.0
  %127 = vmatprep.subr.mxu0 0.0
  %128 = vmatpush1.msra.mxu0 0.0
  %129 = vmatprep.subr.mxu0 0.0
  %130 = vmatpush1.msra.mxu0 0.0
  %131 = vmatprep.subr.mxu0 0.0
  %132 = vmatpush1.msra.mxu0 0.0
  %133 = vmatprep.subr.mxu0 0.0
  %134 = vmatpush1.msra.mxu0 0.0
  %135 = vmatprep.subr.mxu0 0.0
  %136 = vmatpush1.msra.mxu0 0.0
  %137 = vmatprep.subr.mxu0 0.0
  %138 = vmatpush1.msra.mxu0 0.0
  %139 = vmatprep.subr.mxu0 0.0
  %140 = vmatpush1.msra.mxu0 0.0
  %141 = vmatprep.subr.mxu0 0.0
  %142 = vmatpush1.msra.mxu0 0.0
  %143 = vmatprep.subr.mxu0 0.0
  %144 = vmatpush1.msra.mxu0 0.0
  %145 = vmatprep.mubr.f32.mxu0 0.0
  %146 = vmatmul.mubr.f32.gmra.mrb[0].mxu0 %v70
  %v147 = vpop.f32.mrb[0].mxu0
  %v148 = vadd.f32 %v51, %v147
  %v149 = vpop.f32.mrb[0].mxu0
  %v150 = vadd.f32 %v51, %v149
  %151 = vmatprep.mubr.f32.mxu0 0.0
  %152 = vmatmul.mubr.f32.gmra.mrb[0].mxu0 %v73
  %v153 = vpop.f32.mrb[0].mxu0
  %v154 = vadd.f32 %v56, %v153
  %v155 = vpop.f32.mrb[0].mxu0
  %v156 = vadd.f32 %v56, %v155
  %157 = vmatprep.mubr.f32.mxu0 0.0
  %158 = vmatmul.mubr.f32.gmra.mrb[0].mxu0 %v76
  %v159 = vpop.f32.mrb[0].mxu0
  %v160 = vadd.f32 %v61, %v159
  %v161 = vpop.f32.mrb[0].mxu0
  %v162 = vadd.f32 %v61, %v161
  %163 = vmatprep.mubr.f32.mxu0 0.0
  %164 = vmatmul.mubr.f32.gmra.mrb[0].mxu0 %v79
  %v165 = vpop.f32.mrb[0].mxu0
  %v166 = vadd.f32 %v66, %v165
  %v167 = vpop.f32.mrb[0].mxu0
  %v168 = vadd.f32 %v66, %v167
  %169 = vdwg.mxu0
  %170 = vmatprep.subr.mxu0 %v17
  %171 = vmatpush1.msra.mxu0 %v16
  %172 = vmatprep.subr.mxu0 %v21
  %173 = vmatpush1.msra.mxu0 %v20
  %174 = vmatprep.subr.mxu0 0.0
  %175 = vmatpush1.msra.mxu0 0.0
  %176 = vmatprep.subr.mxu0 0.0
  %177 = vmatpush1.msra.mxu0 0.0
  %178 = vmatprep.subr.mxu0 0.0
  %179 = vmatpush1.msra.mxu0 0.0
  %180 = vmatprep.subr.mxu0 0.0
  %181 = vmatpush1.msra.mxu0 0.0
  %182 = vmatprep.subr.mxu0 0.0
  %183 = vmatpush1.msra.mxu0 0.0
  %184 = vmatprep.subr.mxu0 0.0
  %185 = vmatpush1.msra.mxu0 0.0
  %186 = vmatprep.subr.mxu0 0.0
  %187 = vmatpush1.msra.mxu0 0.0
  %188 = vmatprep.subr.mxu0 0.0
  %189 = vmatpush1.msra.mxu0 0.0
  %190 = vmatprep.subr.mxu0 0.0
  %191 = vmatpush1.msra.mxu0 0.0
  %192 = vmatprep.subr.mxu0 0.0
  %193 = vmatpush1.msra.mxu0 0.0
  %194 = vmatprep.subr.mxu0 0.0
  %195 = vmatpush1.msra.mxu0 0.0
  %196 = vmatprep.subr.mxu0 0.0
  %197 = vmatpush1.msra.mxu0 0.0
  %198 = vmatprep.subr.mxu0 0.0
  %199 = vmatpush1.msra.mxu0 0.0
  %200 = vmatprep.subr.mxu0 0.0
  %201 = vmatpush1.msra.mxu0 0.0
  %202 = vmatprep.subr.mxu0 0.0
  %203 = vmatpush1.msra.mxu0 0.0
  %204 = vmatprep.subr.mxu0 0.0
  %205 = vmatpush1.msra.mxu0 0.0
  %206 = vmatprep.subr.mxu0 0.0
  %207 = vmatpush1.msra.mxu0 0.0
  %208 = vmatprep.subr.mxu0 0.0
  %209 = vmatpush1.msra.mxu0 0.0
  %210 = vmatprep.subr.mxu0 0.0
  %211 = vmatpush1.msra.mxu0 0.0
  %212 = vmatprep.subr.mxu0 0.0
  %213 = vmatpush1.msra.mxu0 0.0
  %214 = vmatprep.subr.mxu0 0.0
  %215 = vmatpush1.msra.mxu0 0.0
  %216 = vmatprep.subr.mxu0 0.0
  %217 = vmatpush1.msra.mxu0 0.0
  %218 = vmatprep.subr.mxu0 0.0
  %219 = vmatpush1.msra.mxu0 0.0
  %220 = vmatprep.subr.mxu0 0.0
  %221 = vmatpush1.msra.mxu0 0.0
  %222 = vmatprep.subr.mxu0 0.0
  %223 = vmatpush1.msra.mxu0 0.0
  %224 = vmatprep.subr.mxu0 0.0
  %225 = vmatpush1.msra.mxu0 0.0
  %226 = vmatprep.subr.mxu0 0.0
  %227 = vmatpush1.msra.mxu0 0.0
  %228 = vmatprep.subr.mxu0 0.0
  %229 = vmatpush1.msra.mxu0 0.0
  %230 = vmatprep.subr.mxu0 0.0
  %231 = vmatpush1.msra.mxu0 0.0
  %232 = vmatprep.subr.mxu0 0.0
  %233 = vmatpush1.msra.mxu0 0.0
  %234 = vmatprep.mubr.f32.mxu0 0.0
  %235 = vmatmul.mubr.f32.gmra.mrb[0].mxu0 %v70
  %v236 = vpop.f32.mrb[0].mxu0
  %v237 = vadd.f32 %v51, %v236
  %v238 = vpop.f32.mrb[0].mxu0
  %v239 = vadd.f32 %v51, %v238
  %240 = vmatprep.mubr.f32.mxu0 0.0
  %241 = vmatmul.mubr.f32.gmra.mrb[0].mxu0 %v73
  %v242 = vpop.f32.mrb[0].mxu0
  %v243 = vadd.f32 %v56, %v242
  %v244 = vpop.f32.mrb[0].mxu0
  %v245 = vadd.f32 %v56, %v244
  %246 = vmatprep.mubr.f32.mxu0 0.0
  %247 = vmatmul.mubr.f32.gmra.mrb[0].mxu0 %v76
  %v248 = vpop.f32.mrb[0].mxu0
  %v249 = vadd.f32 %v61, %v248
  %v250 = vpop.f32.mrb[0].mxu0
  %v251 = vadd.f32 %v61, %v250
  %252 = vmatprep.mubr.f32.mxu0 0.0
  %253 = vmatmul.mubr.f32.gmra.mrb[0].mxu0 %v79
  %v254 = vpop.f32.mrb[0].mxu0
  %v255 = vadd.f32 %v66, %v254
  %v256 = vpop.f32.mrb[0].mxu0
  %v257 = vadd.f32 %v66, %v256
  %258 = vdwg.mxu0
  %v259 = vxor.u32 %v148, 2147483648
  %v260 = vxor.u32 %v150, 2147483648
  %v261 = vxor.u32 %v237, 2147483648
  %v262 = vxor.u32 %v239, 2147483648
  %v263 = vxor.u32 %v154, 2147483648
  %v264 = vxor.u32 %v156, 2147483648
  %v265 = vxor.u32 %v243, 2147483648
  %v266 = vxor.u32 %v245, 2147483648
  %v267 = vxor.u32 %v160, 2147483648
  %v268 = vxor.u32 %v162, 2147483648
  %v269 = vxor.u32 %v249, 2147483648
  %v270 = vxor.u32 %v251, 2147483648
  %v271 = vxor.u32 %v166, 2147483648
  %v272 = vxor.u32 %v168, 2147483648
  %v273 = vxor.u32 %v255, 2147483648
  %v274 = vxor.u32 %v257, 2147483648
  %v275 = vmul.f32 %v259, 1.442695
  %v276 = vpow.pop %v275
  %v277 = vmul.f32 %v260, 1.442695
  %v278 = vpow.pop %v277
  %v279 = vmul.f32 %v261, 1.442695
  %v280 = vpow.pop %v279
  %v281 = vmul.f32 %v262, 1.442695
  %v282 = vpow.pop %v281
  %v283 = vmul.f32 %v263, 1.442695
  %v284 = vpow.pop %v283
  %v285 = vmul.f32 %v264, 1.442695
  %v286 = vpow.pop %v285
  %v287 = vmul.f32 %v265, 1.442695
  %v288 = vpow.pop %v287
  %v289 = vmul.f32 %v266, 1.442695
  %v290 = vpow.pop %v289
  %v291 = vmul.f32 %v267, 1.442695
  %v292 = vpow.pop %v291
  %v293 = vmul.f32 %v268, 1.442695
  %v294 = vpow.pop %v293
  %v295 = vmul.f32 %v269, 1.442695
  %v296 = vpow.pop %v295
  %v297 = vmul.f32 %v270, 1.442695
  %v298 = vpow.pop %v297
  %v299 = vmul.f32 %v271, 1.442695
  %v300 = vpow.pop %v299
  %v301 = vmul.f32 %v272, 1.442695
  %v302 = vpow.pop %v301
  %v303 = vmul.f32 %v273, 1.442695
  %v304 = vpow.pop %v303
  %v305 = vmul.f32 %v274, 1.442695
  %v306 = vpow.pop %v305
  %v307 = vadd.f32 %v276, 1.0
  %v308 = vadd.f32 %v278, 1.0
  %v309 = vadd.f32 %v280, 1.0
  %v310 = vadd.f32 %v282, 1.0
  %v311 = vadd.f32 %v284, 1.0
  %v312 = vadd.f32 %v286, 1.0
  %v313 = vadd.f32 %v288, 1.0
  %v314 = vadd.f32 %v290, 1.0
  %v315 = vadd.f32 %v292, 1.0
  %v316 = vadd.f32 %v294, 1.0
  %v317 = vadd.f32 %v296, 1.0
  %v318 = vadd.f32 %v298, 1.0
  %v319 = vadd.f32 %v300, 1.0
  %v320 = vadd.f32 %v302, 1.0
  %v321 = vadd.f32 %v304, 1.0
  %v322 = vadd.f32 %v306, 1.0
  %v323 = vrcp.pop %v307
  %v324 = vmul.f32 1.0, %v323
  %v325 = vrcp.pop %v308
  %v326 = vmul.f32 1.0, %v325
  %v327 = vrcp.pop %v309
  %v328 = vmul.f32 1.0, %v327
  %v329 = vrcp.pop %v310
  %v330 = vmul.f32 1.0, %v329
  %v331 = vrcp.pop %v311
  %v332 = vmul.f32 1.0, %v331
  %v333 = vrcp.pop %v312
  %v334 = vmul.f32 1.0, %v333
  %v335 = vrcp.pop %v313
  %v336 = vmul.f32 1.0, %v335
  %v337 = vrcp.pop %v314
  %v338 = vmul.f32 1.0, %v337
  %v339 = vrcp.pop %v315
  %v340 = vmul.f32 1.0, %v339
  %v341 = vrcp.pop %v316
  %v342 = vmul.f32 1.0, %v341
  %v343 = vrcp.pop %v317
  %v344 = vmul.f32 1.0, %v343
  %v345 = vrcp.pop %v318
  %v346 = vmul.f32 1.0, %v345
  %v347 = vrcp.pop %v319
  %v348 = vmul.f32 1.0, %v347
  %v349 = vrcp.pop %v320
  %v350 = vmul.f32 1.0, %v349
  %v351 = vrcp.pop %v321
  %v352 = vmul.f32 1.0, %v351
  %v353 = vrcp.pop %v322
  %v354 = vmul.f32 1.0, %v353
  %356 = vset.pattern.permute.xlu0 0
  %357 = vperm.xlu0 %356, %v39
  %v358 = vpop.permute.xlu0 %357
  %361 = vset.pattern.permute.xlu0 0
  %362 = vperm.xlu0 %361, %v40
  %v363 = vpop.permute.xlu0 %362
  %366 = vset.pattern.permute.xlu0 0
  %367 = vperm.xlu0 %366, %v41
  %v368 = vpop.permute.xlu0 %367
  %371 = vset.pattern.permute.xlu0 0
  %372 = vperm.xlu0 %371, %v42
  %v373 = vpop.permute.xlu0 %372
  %vm375 = vcmask 261120
  %v377 = vsel %vm375, %v26, 0
  %v380 = vsel %vm375, %v27, 0
  %v383 = vsel %vm375, %v28, 0
  %v386 = vsel %vm375, %v29, 0
  %388 = vmatprep.subr.mxu0 %v326
  %389 = vmatpush1.msra.mxu0 %v324
  %390 = vmatprep.subr.mxu0 %v334
  %391 = vmatpush1.msra.mxu0 %v332
  %392 = vmatprep.subr.mxu0 %v342
  %393 = vmatpush1.msra.mxu0 %v340
  %394 = vmatprep.subr.mxu0 %v350
  %395 = vmatpush1.msra.mxu0 %v348
  %396 = vmatprep.subr.mxu0 0.0
  %397 = vmatpush1.msra.mxu0 0.0
  %398 = vmatprep.subr.mxu0 0.0
  %399 = vmatpush1.msra.mxu0 0.0
  %400 = vmatprep.subr.mxu0 0.0
  %401 = vmatpush1.msra.mxu0 0.0
  %402 = vmatprep.subr.mxu0 0.0
  %403 = vmatpush1.msra.mxu0 0.0
  %404 = vmatprep.subr.mxu0 0.0
  %405 = vmatpush1.msra.mxu0 0.0
  %406 = vmatprep.subr.mxu0 0.0
  %407 = vmatpush1.msra.mxu0 0.0
  %408 = vmatprep.subr.mxu0 0.0
  %409 = vmatpush1.msra.mxu0 0.0
  %410 = vmatprep.subr.mxu0 0.0
  %411 = vmatpush1.msra.mxu0 0.0
  %412 = vmatprep.subr.mxu0 0.0
  %413 = vmatpush1.msra.mxu0 0.0
  %414 = vmatprep.subr.mxu0 0.0
  %415 = vmatpush1.msra.mxu0 0.0
  %416 = vmatprep.subr.mxu0 0.0
  %417 = vmatpush1.msra.mxu0 0.0
  %418 = vmatprep.subr.mxu0 0.0
  %419 = vmatpush1.msra.mxu0 0.0
  %420 = vmatprep.subr.mxu0 0.0
  %421 = vmatpush1.msra.mxu0 0.0
  %422 = vmatprep.subr.mxu0 0.0
  %423 = vmatpush1.msra.mxu0 0.0
  %424 = vmatprep.subr.mxu0 0.0
  %425 = vmatpush1.msra.mxu0 0.0
  %426 = vmatprep.subr.mxu0 0.0
  %427 = vmatpush1.msra.mxu0 0.0
  %428 = vmatprep.subr.mxu0 0.0
  %429 = vmatpush1.msra.mxu0 0.0
  %430 = vmatprep.subr.mxu0 0.0
  %431 = vmatpush1.msra.mxu0 0.0
  %432 = vmatprep.subr.mxu0 0.0
  %433 = vmatpush1.msra.mxu0 0.0
  %434 = vmatprep.subr.mxu0 0.0
  %435 = vmatpush1.msra.mxu0 0.0
  %436 = vmatprep.subr.mxu0 0.0
  %437 = vmatpush1.msra.mxu0 0.0
  %438 = vmatprep.subr.mxu0 0.0
  %439 = vmatpush1.msra.mxu0 0.0
  %440 = vmatprep.subr.mxu0 0.0
  %441 = vmatpush1.msra.mxu0 0.0
  %442 = vmatprep.subr.mxu0 0.0
  %443 = vmatpush1.msra.mxu0 0.0
  %444 = vmatprep.subr.mxu0 0.0
  %445 = vmatpush1.msra.mxu0 0.0
  %446 = vmatprep.subr.mxu0 0.0
  %447 = vmatpush1.msra.mxu0 0.0
  %448 = vmatprep.subr.mxu0 0.0
  %449 = vmatpush1.msra.mxu0 0.0
  %450 = vmatprep.subr.mxu0 0.0
  %451 = vmatpush1.msra.mxu0 0.0
  %452 = vmatprep.mubr.f32.mxu0 0.0
  %453 = vmatmul.mubr.f32.gmra.mrb[0].mxu0 %v377
  %v454 = vpop.f32.mrb[0].mxu0
  %v455 = vadd.f32 %v358, %v454
  %v456 = vpop.f32.mrb[0].mxu0
  %v457 = vadd.f32 %v358, %v456
  %458 = vmatprep.mubr.f32.mxu0 0.0
  %459 = vmatmul.mubr.f32.gmra.mrb[0].mxu0 %v380
  %v460 = vpop.f32.mrb[0].mxu0
  %v461 = vadd.f32 %v363, %v460
  %v462 = vpop.f32.mrb[0].mxu0
  %v463 = vadd.f32 %v363, %v462
  %464 = vmatprep.mubr.f32.mxu0 0.0
  %465 = vmatmul.mubr.f32.gmra.mrb[0].mxu0 %v383
  %v466 = vpop.f32.mrb[0].mxu0
  %v467 = vadd.f32 %v368, %v466
  %v468 = vpop.f32.mrb[0].mxu0
  %v469 = vadd.f32 %v368, %v468
  %470 = vmatprep.mubr.f32.mxu0 0.0
  %471 = vmatmul.mubr.f32.gmra.mrb[0].mxu0 %v386
  %v472 = vpop.f32.mrb[0].mxu0
  %v473 = vadd.f32 %v373, %v472
  %v474 = vpop.f32.mrb[0].mxu0
  %v475 = vadd.f32 %v373, %v474
  %476 = vdwg.mxu0
  %477 = vmatprep.subr.mxu0 %v330
  %478 = vmatpush1.msra.mxu0 %v328
  %479 = vmatprep.subr.mxu0 %v338
  %480 = vmatpush1.msra.mxu0 %v336
  %481 = vmatprep.subr.mxu0 %v346
  %482 = vmatpush1.msra.mxu0 %v344
  %483 = vmatprep.subr.mxu0 %v354
  %484 = vmatpush1.msra.mxu0 %v352
  %485 = vmatprep.subr.mxu0 0.0
  %486 = vmatpush1.msra.mxu0 0.0
  %487 = vmatprep.subr.mxu0 0.0
  %488 = vmatpush1.msra.mxu0 0.0
  %489 = vmatprep.subr.mxu0 0.0
  %490 = vmatpush1.msra.mxu0 0.0
  %491 = vmatprep.subr.mxu0 0.0
  %492 = vmatpush1.msra.mxu0 0.0
  %493 = vmatprep.subr.mxu0 0.0
  %494 = vmatpush1.msra.mxu0 0.0
  %495 = vmatprep.subr.mxu0 0.0
  %496 = vmatpush1.msra.mxu0 0.0
  %497 = vmatprep.subr.mxu0 0.0
  %498 = vmatpush1.msra.mxu0 0.0
  %499 = vmatprep.subr.mxu0 0.0
  %500 = vmatpush1.msra.mxu0 0.0
  %501 = vmatprep.subr.mxu0 0.0
  %502 = vmatpush1.msra.mxu0 0.0
  %503 = vmatprep.subr.mxu0 0.0
  %504 = vmatpush1.msra.mxu0 0.0
  %505 = vmatprep.subr.mxu0 0.0
  %506 = vmatpush1.msra.mxu0 0.0
  %507 = vmatprep.subr.mxu0 0.0
  %508 = vmatpush1.msra.mxu0 0.0
  %509 = vmatprep.subr.mxu0 0.0
  %510 = vmatpush1.msra.mxu0 0.0
  %511 = vmatprep.subr.mxu0 0.0
  %512 = vmatpush1.msra.mxu0 0.0
  %513 = vmatprep.subr.mxu0 0.0
  %514 = vmatpush1.msra.mxu0 0.0
  %515 = vmatprep.subr.mxu0 0.0
  %516 = vmatpush1.msra.mxu0 0.0
  %517 = vmatprep.subr.mxu0 0.0
  %518 = vmatpush1.msra.mxu0 0.0
  %519 = vmatprep.subr.mxu0 0.0
  %520 = vmatpush1.msra.mxu0 0.0
  %521 = vmatprep.subr.mxu0 0.0
  %522 = vmatpush1.msra.mxu0 0.0
  %523 = vmatprep.subr.mxu0 0.0
  %524 = vmatpush1.msra.mxu0 0.0
  %525 = vmatprep.subr.mxu0 0.0
  %526 = vmatpush1.msra.mxu0 0.0
  %527 = vmatprep.subr.mxu0 0.0
  %528 = vmatpush1.msra.mxu0 0.0
  %529 = vmatprep.subr.mxu0 0.0
  %530 = vmatpush1.msra.mxu0 0.0
  %531 = vmatprep.subr.mxu0 0.0
  %532 = vmatpush1.msra.mxu0 0.0
  %533 = vmatprep.subr.mxu0 0.0
  %534 = vmatpush1.msra.mxu0 0.0
  %535 = vmatprep.subr.mxu0 0.0
  %536 = vmatpush1.msra.mxu0 0.0
  %537 = vmatprep.subr.mxu0 0.0
  %538 = vmatpush1.msra.mxu0 0.0
  %539 = vmatprep.subr.mxu0 0.0
  %540 = vmatpush1.msra.mxu0 0.0
  %541 = vmatprep.mubr.f32.mxu0 0.0
  %542 = vmatmul.mubr.f32.gmra.mrb[0].mxu0 %v377
  %v543 = vpop.f32.mrb[0].mxu0
  %v544 = vadd.f32 %v358, %v543
  %v545 = vpop.f32.mrb[0].mxu0
  %v546 = vadd.f32 %v358, %v545
  %547 = vmatprep.mubr.f32.mxu0 0.0
  %548 = vmatmul.mubr.f32.gmra.mrb[0].mxu0 %v380
  %v549 = vpop.f32.mrb[0].mxu0
  %v550 = vadd.f32 %v363, %v549
  %v551 = vpop.f32.mrb[0].mxu0
  %v552 = vadd.f32 %v363, %v551
  %553 = vmatprep.mubr.f32.mxu0 0.0
  %554 = vmatmul.mubr.f32.gmra.mrb[0].mxu0 %v383
  %v555 = vpop.f32.mrb[0].mxu0
  %v556 = vadd.f32 %v368, %v555
  %v557 = vpop.f32.mrb[0].mxu0
  %v558 = vadd.f32 %v368, %v557
  %559 = vmatprep.mubr.f32.mxu0 0.0
  %560 = vmatmul.mubr.f32.gmra.mrb[0].mxu0 %v386
  %v561 = vpop.f32.mrb[0].mxu0
  %v562 = vadd.f32 %v373, %v561
  %v563 = vpop.f32.mrb[0].mxu0
  %v564 = vadd.f32 %v373, %v563
  %565 = vdwg.mxu0
  %v566 = vxor.u32 %v455, 2147483648
  %v567 = vxor.u32 %v457, 2147483648
  %v568 = vxor.u32 %v544, 2147483648
  %v569 = vxor.u32 %v546, 2147483648
  %v570 = vxor.u32 %v461, 2147483648
  %v571 = vxor.u32 %v463, 2147483648
  %v572 = vxor.u32 %v550, 2147483648
  %v573 = vxor.u32 %v552, 2147483648
  %v574 = vxor.u32 %v467, 2147483648
  %v575 = vxor.u32 %v469, 2147483648
  %v576 = vxor.u32 %v556, 2147483648
  %v577 = vxor.u32 %v558, 2147483648
  %v578 = vxor.u32 %v473, 2147483648
  %v579 = vxor.u32 %v475, 2147483648
  %v580 = vxor.u32 %v562, 2147483648
  %v581 = vxor.u32 %v564, 2147483648
  %v582 = vmul.f32 %v566, 1.442695
  %v583 = vpow.pop %v582
  %v584 = vmul.f32 %v567, 1.442695
  %v585 = vpow.pop %v584
  %v586 = vmul.f32 %v568, 1.442695
  %v587 = vpow.pop %v586
  %v588 = vmul.f32 %v569, 1.442695
  %v589 = vpow.pop %v588
  %v590 = vmul.f32 %v570, 1.442695
  %v591 = vpow.pop %v590
  %v592 = vmul.f32 %v571, 1.442695
  %v593 = vpow.pop %v592
  %v594 = vmul.f32 %v572, 1.442695
  %v595 = vpow.pop %v594
  %v596 = vmul.f32 %v573, 1.442695
  %v597 = vpow.pop %v596
  %v598 = vmul.f32 %v574, 1.442695
  %v599 = vpow.pop %v598
  %v600 = vmul.f32 %v575, 1.442695
  %v601 = vpow.pop %v600
  %v602 = vmul.f32 %v576, 1.442695
  %v603 = vpow.pop %v602
  %v604 = vmul.f32 %v577, 1.442695
  %v605 = vpow.pop %v604
  %v606 = vmul.f32 %v578, 1.442695
  %v607 = vpow.pop %v606
  %v608 = vmul.f32 %v579, 1.442695
  %v609 = vpow.pop %v608
  %v610 = vmul.f32 %v580, 1.442695
  %v611 = vpow.pop %v610
  %v612 = vmul.f32 %v581, 1.442695
  %v613 = vpow.pop %v612
  %v614 = vadd.f32 %v583, 1.0
  %v615 = vadd.f32 %v585, 1.0
  %v616 = vadd.f32 %v587, 1.0
  %v617 = vadd.f32 %v589, 1.0
  %v618 = vadd.f32 %v591, 1.0
  %v619 = vadd.f32 %v593, 1.0
  %v620 = vadd.f32 %v595, 1.0
  %v621 = vadd.f32 %v597, 1.0
  %v622 = vadd.f32 %v599, 1.0
  %v623 = vadd.f32 %v601, 1.0
  %v624 = vadd.f32 %v603, 1.0
  %v625 = vadd.f32 %v605, 1.0
  %v626 = vadd.f32 %v607, 1.0
  %v627 = vadd.f32 %v609, 1.0
  %v628 = vadd.f32 %v611, 1.0
  %v629 = vadd.f32 %v613, 1.0
  %v630 = vrcp.pop %v614
  %v631 = vmul.f32 1.0, %v630
  %v632 = vrcp.pop %v615
  %v633 = vmul.f32 1.0, %v632
  %v634 = vrcp.pop %v616
  %v635 = vmul.f32 1.0, %v634
  %v636 = vrcp.pop %v617
  %v637 = vmul.f32 1.0, %v636
  %v638 = vrcp.pop %v618
  %v639 = vmul.f32 1.0, %v638
  %v640 = vrcp.pop %v619
  %v641 = vmul.f32 1.0, %v640
  %v642 = vrcp.pop %v620
  %v643 = vmul.f32 1.0, %v642
  %v644 = vrcp.pop %v621
  %v645 = vmul.f32 1.0, %v644
  %v646 = vrcp.pop %v622
  %v647 = vmul.f32 1.0, %v646
  %v648 = vrcp.pop %v623
  %v649 = vmul.f32 1.0, %v648
  %v650 = vrcp.pop %v624
  %v651 = vmul.f32 1.0, %v650
  %v652 = vrcp.pop %v625
  %v653 = vmul.f32 1.0, %v652
  %v654 = vrcp.pop %v626
  %v655 = vmul.f32 1.0, %v654
  %v656 = vrcp.pop %v627
  %v657 = vmul.f32 1.0, %v656
  %v658 = vrcp.pop %v628
  %v659 = vmul.f32 1.0, %v658
  %v660 = vrcp.pop %v629
  %v661 = vmul.f32 1.0, %v660
  %663 = vset.pattern.permute.xlu0 0
  %664 = vperm.xlu0 %663, %v43
  %v665 = vpop.permute.xlu0 %664
  %668 = vset.pattern.permute.xlu0 0
  %669 = vperm.xlu0 %668, %v44
  %v670 = vpop.permute.xlu0 %669
  %673 = vset.pattern.permute.xlu0 0
  %674 = vperm.xlu0 %673, %v45
  %v675 = vpop.permute.xlu0 %674
  %678 = vset.pattern.permute.xlu0 0
  %679 = vperm.xlu0 %678, %v46
  %v680 = vpop.permute.xlu0 %679
  %v683 = vsel %vm375, %v30, 0
  %v686 = vsel %vm375, %v31, 0
  %v689 = vsel %vm375, %v32, 0
  %v692 = vsel %vm375, %v33, 0
  %694 = vmatprep.subr.mxu0 %v633
  %695 = vmatpush1.msra.mxu0 %v631
  %696 = vmatprep.subr.mxu0 %v641
  %697 = vmatpush1.msra.mxu0 %v639
  %698 = vmatprep.subr.mxu0 %v649
  %699 = vmatpush1.msra.mxu0 %v647
  %700 = vmatprep.subr.mxu0 %v657
  %701 = vmatpush1.msra.mxu0 %v655
  %702 = vmatprep.subr.mxu0 0.0
  %703 = vmatpush1.msra.mxu0 0.0
  %704 = vmatprep.subr.mxu0 0.0
  %705 = vmatpush1.msra.mxu0 0.0
  %706 = vmatprep.subr.mxu0 0.0
  %707 = vmatpush1.msra.mxu0 0.0
  %708 = vmatprep.subr.mxu0 0.0
  %709 = vmatpush1.msra.mxu0 0.0
  %710 = vmatprep.subr.mxu0 0.0
  %711 = vmatpush1.msra.mxu0 0.0
  %712 = vmatprep.subr.mxu0 0.0
  %713 = vmatpush1.msra.mxu0 0.0
  %714 = vmatprep.subr.mxu0 0.0
  %715 = vmatpush1.msra.mxu0 0.0
  %716 = vmatprep.subr.mxu0 0.0
  %717 = vmatpush1.msra.mxu0 0.0
  %718 = vmatprep.subr.mxu0 0.0
  %719 = vmatpush1.msra.mxu0 0.0
  %720 = vmatprep.subr.mxu0 0.0
  %721 = vmatpush1.msra.mxu0 0.0
  %722 = vmatprep.subr.mxu0 0.0
  %723 = vmatpush1.msra.mxu0 0.0
  %724 = vmatprep.subr.mxu0 0.0
  %725 = vmatpush1.msra.mxu0 0.0
  %726 = vmatprep.subr.mxu0 0.0
  %727 = vmatpush1.msra.mxu0 0.0
  %728 = vmatprep.subr.mxu0 0.0
  %729 = vmatpush1.msra.mxu0 0.0
  %730 = vmatprep.subr.mxu0 0.0
  %731 = vmatpush1.msra.mxu0 0.0
  %732 = vmatprep.subr.mxu0 0.0
  %733 = vmatpush1.msra.mxu0 0.0
  %734 = vmatprep.subr.mxu0 0.0
  %735 = vmatpush1.msra.mxu0 0.0
  %736 = vmatprep.subr.mxu0 0.0
  %737 = vmatpush1.msra.mxu0 0.0
  %738 = vmatprep.subr.mxu0 0.0
  %739 = vmatpush1.msra.mxu0 0.0
  %740 = vmatprep.subr.mxu0 0.0
  %741 = vmatpush1.msra.mxu0 0.0
  %742 = vmatprep.subr.mxu0 0.0
  %743 = vmatpush1.msra.mxu0 0.0
  %744 = vmatprep.subr.mxu0 0.0
  %745 = vmatpush1.msra.mxu0 0.0
  %746 = vmatprep.subr.mxu0 0.0
  %747 = vmatpush1.msra.mxu0 0.0
  %748 = vmatprep.subr.mxu0 0.0
  %749 = vmatpush1.msra.mxu0 0.0
  %750 = vmatprep.subr.mxu0 0.0
  %751 = vmatpush1.msra.mxu0 0.0
  %752 = vmatprep.subr.mxu0 0.0
  %753 = vmatpush1.msra.mxu0 0.0
  %754 = vmatprep.subr.mxu0 0.0
  %755 = vmatpush1.msra.mxu0 0.0
  %756 = vmatprep.subr.mxu0 0.0
  %757 = vmatpush1.msra.mxu0 0.0
  %758 = vmatprep.mubr.f32.mxu0 0.0
  %759 = vmatmul.mubr.f32.gmra.mrb[0].mxu0 %v683
  %v760 = vpop.f32.mrb[0].mxu0
  %v761 = vadd.f32 %v665, %v760
  %v762 = vpop.f32.mrb[0].mxu0
  %v763 = vadd.f32 %v665, %v762
  %764 = vmatprep.mubr.f32.mxu0 0.0
  %765 = vmatmul.mubr.f32.gmra.mrb[0].mxu0 %v686
  %v766 = vpop.f32.mrb[0].mxu0
  %v767 = vadd.f32 %v670, %v766
  %v768 = vpop.f32.mrb[0].mxu0
  %v769 = vadd.f32 %v670, %v768
  %770 = vmatprep.mubr.f32.mxu0 0.0
  %771 = vmatmul.mubr.f32.gmra.mrb[0].mxu0 %v689
  %v772 = vpop.f32.mrb[0].mxu0
  %v773 = vadd.f32 %v675, %v772
  %v774 = vpop.f32.mrb[0].mxu0
  %v775 = vadd.f32 %v675, %v774
  %776 = vmatprep.mubr.f32.mxu0 0.0
  %777 = vmatmul.mubr.f32.gmra.mrb[0].mxu0 %v692
  %v778 = vpop.f32.mrb[0].mxu0
  %v779 = vadd.f32 %v680, %v778
  %v780 = vpop.f32.mrb[0].mxu0
  %v781 = vadd.f32 %v680, %v780
  %782 = vdwg.mxu0
  %783 = vmatprep.subr.mxu0 %v637
  %784 = vmatpush1.msra.mxu0 %v635
  %785 = vmatprep.subr.mxu0 %v645
  %786 = vmatpush1.msra.mxu0 %v643
  %787 = vmatprep.subr.mxu0 %v653
  %788 = vmatpush1.msra.mxu0 %v651
  %789 = vmatprep.subr.mxu0 %v661
  %790 = vmatpush1.msra.mxu0 %v659
  %791 = vmatprep.subr.mxu0 0.0
  %792 = vmatpush1.msra.mxu0 0.0
  %793 = vmatprep.subr.mxu0 0.0
  %794 = vmatpush1.msra.mxu0 0.0
  %795 = vmatprep.subr.mxu0 0.0
  %796 = vmatpush1.msra.mxu0 0.0
  %797 = vmatprep.subr.mxu0 0.0
  %798 = vmatpush1.msra.mxu0 0.0
  %799 = vmatprep.subr.mxu0 0.0
  %800 = vmatpush1.msra.mxu0 0.0
  %801 = vmatprep.subr.mxu0 0.0
  %802 = vmatpush1.msra.mxu0 0.0
  %803 = vmatprep.subr.mxu0 0.0
  %804 = vmatpush1.msra.mxu0 0.0
  %805 = vmatprep.subr.mxu0 0.0
  %806 = vmatpush1.msra.mxu0 0.0
  %807 = vmatprep.subr.mxu0 0.0
  %808 = vmatpush1.msra.mxu0 0.0
  %809 = vmatprep.subr.mxu0 0.0
  %810 = vmatpush1.msra.mxu0 0.0
  %811 = vmatprep.subr.mxu0 0.0
  %812 = vmatpush1.msra.mxu0 0.0
  %813 = vmatprep.subr.mxu0 0.0
  %814 = vmatpush1.msra.mxu0 0.0
  %815 = vmatprep.subr.mxu0 0.0
  %816 = vmatpush1.msra.mxu0 0.0
  %817 = vmatprep.subr.mxu0 0.0
  %818 = vmatpush1.msra.mxu0 0.0
  %819 = vmatprep.subr.mxu0 0.0
  %820 = vmatpush1.msra.mxu0 0.0
  %821 = vmatprep.subr.mxu0 0.0
  %822 = vmatpush1.msra.mxu0 0.0
  %823 = vmatprep.subr.mxu0 0.0
  %824 = vmatpush1.msra.mxu0 0.0
  %825 = vmatprep.subr.mxu0 0.0
  %826 = vmatpush1.msra.mxu0 0.0
  %827 = vmatprep.subr.mxu0 0.0
  %828 = vmatpush1.msra.mxu0 0.0
  %829 = vmatprep.subr.mxu0 0.0
  %830 = vmatpush1.msra.mxu0 0.0
  %831 = vmatprep.subr.mxu0 0.0
  %832 = vmatpush1.msra.mxu0 0.0
  %833 = vmatprep.subr.mxu0 0.0
  %834 = vmatpush1.msra.mxu0 0.0
  %835 = vmatprep.subr.mxu0 0.0
  %836 = vmatpush1.msra.mxu0 0.0
  %837 = vmatprep.subr.mxu0 0.0
  %838 = vmatpush1.msra.mxu0 0.0
  %839 = vmatprep.subr.mxu0 0.0
  %840 = vmatpush1.msra.mxu0 0.0
  %841 = vmatprep.subr.mxu0 0.0
  %842 = vmatpush1.msra.mxu0 0.0
  %843 = vmatprep.subr.mxu0 0.0
  %844 = vmatpush1.msra.mxu0 0.0
  %845 = vmatprep.subr.mxu0 0.0
  %846 = vmatpush1.msra.mxu0 0.0
  %847 = vmatprep.mubr.f32.mxu0 0.0
  %848 = vmatmul.mubr.f32.gmra.mrb[0].mxu0 %v683
  %v849 = vpop.f32.mrb[0].mxu0
  %v850 = vadd.f32 %v665, %v849
  %v851 = vpop.f32.mrb[0].mxu0
  %v852 = vadd.f32 %v665, %v851
  %853 = vmatprep.mubr.f32.mxu0 0.0
  %854 = vmatmul.mubr.f32.gmra.mrb[0].mxu0 %v686
  %v855 = vpop.f32.mrb[0].mxu0
  %v856 = vadd.f32 %v670, %v855
  %v857 = vpop.f32.mrb[0].mxu0
  %v858 = vadd.f32 %v670, %v857
  %859 = vmatprep.mubr.f32.mxu0 0.0
  %860 = vmatmul.mubr.f32.gmra.mrb[0].mxu0 %v689
  %v861 = vpop.f32.mrb[0].mxu0
  %v862 = vadd.f32 %v675, %v861
  %v863 = vpop.f32.mrb[0].mxu0
  %v864 = vadd.f32 %v675, %v863
  %865 = vmatprep.mubr.f32.mxu0 0.0
  %866 = vmatmul.mubr.f32.gmra.mrb[0].mxu0 %v692
  %v867 = vpop.f32.mrb[0].mxu0
  %v868 = vadd.f32 %v680, %v867
  %v869 = vpop.f32.mrb[0].mxu0
  %v870 = vadd.f32 %v680, %v869
  %871 = vdwg.mxu0
  %v872 = vxor.u32 %v761, 2147483648
  %v873 = vxor.u32 %v763, 2147483648
  %v874 = vxor.u32 %v850, 2147483648
  %v875 = vxor.u32 %v852, 2147483648
  %v876 = vxor.u32 %v767, 2147483648
  %v877 = vxor.u32 %v769, 2147483648
  %v878 = vxor.u32 %v856, 2147483648
  %v879 = vxor.u32 %v858, 2147483648
  %v880 = vxor.u32 %v773, 2147483648
  %v881 = vxor.u32 %v775, 2147483648
  %v882 = vxor.u32 %v862, 2147483648
  %v883 = vxor.u32 %v864, 2147483648
  %v884 = vxor.u32 %v779, 2147483648
  %v885 = vxor.u32 %v781, 2147483648
  %v886 = vxor.u32 %v868, 2147483648
  %v887 = vxor.u32 %v870, 2147483648
  %v888 = vmul.f32 %v872, 1.442695
  %v889 = vpow.pop %v888
  %v890 = vmul.f32 %v873, 1.442695
  %v891 = vpow.pop %v890
  %v892 = vmul.f32 %v874, 1.442695
  %v893 = vpow.pop %v892
  %v894 = vmul.f32 %v875, 1.442695
  %v895 = vpow.pop %v894
  %v896 = vmul.f32 %v876, 1.442695
  %v897 = vpow.pop %v896
  %v898 = vmul.f32 %v877, 1.442695
  %v899 = vpow.pop %v898
  %v900 = vmul.f32 %v878, 1.442695
  %v901 = vpow.pop %v900
  %v902 = vmul.f32 %v879, 1.442695
  %v903 = vpow.pop %v902
  %v904 = vmul.f32 %v880, 1.442695
  %v905 = vpow.pop %v904
  %v906 = vmul.f32 %v881, 1.442695
  %v907 = vpow.pop %v906
  %v908 = vmul.f32 %v882, 1.442695
  %v909 = vpow.pop %v908
  %v910 = vmul.f32 %v883, 1.442695
  %v911 = vpow.pop %v910
  %v912 = vmul.f32 %v884, 1.442695
  %v913 = vpow.pop %v912
  %v914 = vmul.f32 %v885, 1.442695
  %v915 = vpow.pop %v914
  %v916 = vmul.f32 %v886, 1.442695
  %v917 = vpow.pop %v916
  %v918 = vmul.f32 %v887, 1.442695
  %v919 = vpow.pop %v918
  %v920 = vadd.f32 %v889, 1.0
  %v921 = vadd.f32 %v891, 1.0
  %v922 = vadd.f32 %v893, 1.0
  %v923 = vadd.f32 %v895, 1.0
  %v924 = vadd.f32 %v897, 1.0
  %v925 = vadd.f32 %v899, 1.0
  %v926 = vadd.f32 %v901, 1.0
  %v927 = vadd.f32 %v903, 1.0
  %v928 = vadd.f32 %v905, 1.0
  %v929 = vadd.f32 %v907, 1.0
  %v930 = vadd.f32 %v909, 1.0
  %v931 = vadd.f32 %v911, 1.0
  %v932 = vadd.f32 %v913, 1.0
  %v933 = vadd.f32 %v915, 1.0
  %v934 = vadd.f32 %v917, 1.0
  %v935 = vadd.f32 %v919, 1.0
  %v936 = vrcp.pop %v920
  %v937 = vmul.f32 1.0, %v936
  %v938 = vrcp.pop %v921
  %v939 = vmul.f32 1.0, %v938
  %v940 = vrcp.pop %v922
  %v941 = vmul.f32 1.0, %v940
  %v942 = vrcp.pop %v923
  %v943 = vmul.f32 1.0, %v942
  %v944 = vrcp.pop %v924
  %v945 = vmul.f32 1.0, %v944
  %v946 = vrcp.pop %v925
  %v947 = vmul.f32 1.0, %v946
  %v948 = vrcp.pop %v926
  %v949 = vmul.f32 1.0, %v948
  %v950 = vrcp.pop %v927
  %v951 = vmul.f32 1.0, %v950
  %v952 = vrcp.pop %v928
  %v953 = vmul.f32 1.0, %v952
  %v954 = vrcp.pop %v929
  %v955 = vmul.f32 1.0, %v954
  %v956 = vrcp.pop %v930
  %v957 = vmul.f32 1.0, %v956
  %v958 = vrcp.pop %v931
  %v959 = vmul.f32 1.0, %v958
  %v960 = vrcp.pop %v932
  %v961 = vmul.f32 1.0, %v960
  %v962 = vrcp.pop %v933
  %v963 = vmul.f32 1.0, %v962
  %v964 = vrcp.pop %v934
  %v965 = vmul.f32 1.0, %v964
  %v966 = vrcp.pop %v935
  %v967 = vmul.f32 1.0, %v966
  %969 = vset.pattern.permute.xlu0 0
  %970 = vperm.xlu0 %969, %v47
  %v971 = vpop.permute.xlu0 %970
  %v974 = vsel %vm375, %v34, 0
  %976 = vmatprep.subr.mxu0 %v939
  %977 = vmatpush1.msra.mxu0 %v937
  %978 = vmatprep.subr.mxu0 %v947
  %979 = vmatpush1.msra.mxu0 %v945
  %980 = vmatprep.subr.mxu0 %v955
  %981 = vmatpush1.msra.mxu0 %v953
  %982 = vmatprep.subr.mxu0 %v963
  %983 = vmatpush1.msra.mxu0 %v961
  %984 = vmatprep.subr.mxu0 0.0
  %985 = vmatpush1.msra.mxu0 0.0
  %986 = vmatprep.subr.mxu0 0.0
  %987 = vmatpush1.msra.mxu0 0.0
  %988 = vmatprep.subr.mxu0 0.0
  %989 = vmatpush1.msra.mxu0 0.0
  %990 = vmatprep.subr.mxu0 0.0
  %991 = vmatpush1.msra.mxu0 0.0
  %992 = vmatprep.subr.mxu0 0.0
  %993 = vmatpush1.msra.mxu0 0.0
  %994 = vmatprep.subr.mxu0 0.0
  %995 = vmatpush1.msra.mxu0 0.0
  %996 = vmatprep.subr.mxu0 0.0
  %997 = vmatpush1.msra.mxu0 0.0
  %998 = vmatprep.subr.mxu0 0.0
  %999 = vmatpush1.msra.mxu0 0.0
  %1000 = vmatprep.subr.mxu0 0.0
  %1001 = vmatpush1.msra.mxu0 0.0
  %1002 = vmatprep.subr.mxu0 0.0
  %1003 = vmatpush1.msra.mxu0 0.0
  %1004 = vmatprep.subr.mxu0 0.0
  %1005 = vmatpush1.msra.mxu0 0.0
  %1006 = vmatprep.subr.mxu0 0.0
  %1007 = vmatpush1.msra.mxu0 0.0
  %1008 = vmatprep.subr.mxu0 0.0
  %1009 = vmatpush1.msra.mxu0 0.0
  %1010 = vmatprep.subr.mxu0 0.0
  %1011 = vmatpush1.msra.mxu0 0.0
  %1012 = vmatprep.subr.mxu0 0.0
  %1013 = vmatpush1.msra.mxu0 0.0
  %1014 = vmatprep.subr.mxu0 0.0
  %1015 = vmatpush1.msra.mxu0 0.0
  %1016 = vmatprep.subr.mxu0 0.0
  %1017 = vmatpush1.msra.mxu0 0.0
  %1018 = vmatprep.subr.mxu0 0.0
  %1019 = vmatpush1.msra.mxu0 0.0
  %1020 = vmatprep.subr.mxu0 0.0
  %1021 = vmatpush1.msra.mxu0 0.0
  %1022 = vmatprep.subr.mxu0 0.0
  %1023 = vmatpush1.msra.mxu0 0.0
  %1024 = vmatprep.subr.mxu0 0.0
  %1025 = vmatpush1.msra.mxu0 0.0
  %1026 = vmatprep.subr.mxu0 0.0
  %1027 = vmatpush1.msra.mxu0 0.0
  %1028 = vmatprep.subr.mxu0 0.0
  %1029 = vmatpush1.msra.mxu0 0.0
  %1030 = vmatprep.subr.mxu0 0.0
  %1031 = vmatpush1.msra.mxu0 0.0
  %1032 = vmatprep.subr.mxu0 0.0
  %1033 = vmatpush1.msra.mxu0 0.0
  %1034 = vmatprep.subr.mxu0 0.0
  %1035 = vmatpush1.msra.mxu0 0.0
  %1036 = vmatprep.subr.mxu0 0.0
  %1037 = vmatpush1.msra.mxu0 0.0
  %1038 = vmatprep.subr.mxu0 0.0
  %1039 = vmatpush1.msra.mxu0 0.0
  %1040 = vmatprep.mubr.f32.mxu0 0.0
  %1041 = vmatmul.mubr.f32.gmra.mrb[0].mxu0 %v974
  %v1042 = vpop.f32.mrb[0].mxu0
  %v1043 = vadd.f32 %v971, %v1042
  %v1044 = vpop.f32.mrb[0].mxu0
  %v1045 = vadd.f32 %v971, %v1044
  %1046 = vdwg.mxu0
  %1047 = vmatprep.subr.mxu0 %v943
  %1048 = vmatpush1.msra.mxu0 %v941
  %1049 = vmatprep.subr.mxu0 %v951
  %1050 = vmatpush1.msra.mxu0 %v949
  %1051 = vmatprep.subr.mxu0 %v959
  %1052 = vmatpush1.msra.mxu0 %v957
  %1053 = vmatprep.subr.mxu0 %v967
  %1054 = vmatpush1.msra.mxu0 %v965
  %1055 = vmatprep.subr.mxu0 0.0
  %1056 = vmatpush1.msra.mxu0 0.0
  %1057 = vmatprep.subr.mxu0 0.0
  %1058 = vmatpush1.msra.mxu0 0.0
  %1059 = vmatprep.subr.mxu0 0.0
  %1060 = vmatpush1.msra.mxu0 0.0
  %1061 = vmatprep.subr.mxu0 0.0
  %1062 = vmatpush1.msra.mxu0 0.0
  %1063 = vmatprep.subr.mxu0 0.0
  %1064 = vmatpush1.msra.mxu0 0.0
  %1065 = vmatprep.subr.mxu0 0.0
  %1066 = vmatpush1.msra.mxu0 0.0
  %1067 = vmatprep.subr.mxu0 0.0
  %1068 = vmatpush1.msra.mxu0 0.0
  %1069 = vmatprep.subr.mxu0 0.0
  %1070 = vmatpush1.msra.mxu0 0.0
  %1071 = vmatprep.subr.mxu0 0.0
  %1072 = vmatpush1.msra.mxu0 0.0
  %1073 = vmatprep.subr.mxu0 0.0
  %1074 = vmatpush1.msra.mxu0 0.0
  %1075 = vmatprep.subr.mxu0 0.0
  %1076 = vmatpush1.msra.mxu0 0.0
  %1077 = vmatprep.subr.mxu0 0.0
  %1078 = vmatpush1.msra.mxu0 0.0
  %1079 = vmatprep.subr.mxu0 0.0
  %1080 = vmatpush1.msra.mxu0 0.0
  %1081 = vmatprep.subr.mxu0 0.0
  %1082 = vmatpush1.msra.mxu0 0.0
  %1083 = vmatprep.subr.mxu0 0.0
  %1084 = vmatpush1.msra.mxu0 0.0
  %1085 = vmatprep.subr.mxu0 0.0
  %1086 = vmatpush1.msra.mxu0 0.0
  %1087 = vmatprep.subr.mxu0 0.0
  %1088 = vmatpush1.msra.mxu0 0.0
  %1089 = vmatprep.subr.mxu0 0.0
  %1090 = vmatpush1.msra.mxu0 0.0
  %1091 = vmatprep.subr.mxu0 0.0
  %1092 = vmatpush1.msra.mxu0 0.0
  %1093 = vmatprep.subr.mxu0 0.0
  %1094 = vmatpush1.msra.mxu0 0.0
  %1095 = vmatprep.subr.mxu0 0.0
  %1096 = vmatpush1.msra.mxu0 0.0
  %1097 = vmatprep.subr.mxu0 0.0
  %1098 = vmatpush1.msra.mxu0 0.0
  %1099 = vmatprep.subr.mxu0 0.0
  %1100 = vmatpush1.msra.mxu0 0.0
  %1101 = vmatprep.subr.mxu0 0.0
  %1102 = vmatpush1.msra.mxu0 0.0
  %1103 = vmatprep.subr.mxu0 0.0
  %1104 = vmatpush1.msra.mxu0 0.0
  %1105 = vmatprep.subr.mxu0 0.0
  %1106 = vmatpush1.msra.mxu0 0.0
  %1107 = vmatprep.subr.mxu0 0.0
  %1108 = vmatpush1.msra.mxu0 0.0
  %1109 = vmatprep.subr.mxu0 0.0
  %1110 = vmatpush1.msra.mxu0 0.0
  %1111 = vmatprep.mubr.f32.mxu0 0.0
  %1112 = vmatmul.mubr.f32.gmra.mrb[0].mxu0 %v974
  %v1113 = vpop.f32.mrb[0].mxu0
  %v1114 = vadd.f32 %v971, %v1113
  %v1115 = vpop.f32.mrb[0].mxu0
  %v1116 = vadd.f32 %v971, %v1115
  %1117 = vdwg.mxu0
  %v1118 = vtanh.pop %v1043
  %v1119 = vtanh.pop %v1045
  %v1120 = vtanh.pop %v1114
  %v1121 = vtanh.pop %v1116
  %1122 = vst [vmem:[%s3] sm:$0xff] %v1118
  %1123 = vst [vmem:[%s3 + $0x8] sm:$0xff] %v1119
  %1124 = vst [vmem:[%s3 + $0x10] sm:$0xff] %v1120
  %1125 = vst [vmem:[%s3 + $0x18] sm:$0xff] %v1121
  // Predicated region
  $region14: #{actor_forward.1} parent=0 // pred_check
    _
  $region15: #{actor_forward.1} parent=0 // pred_check_branch
    %1127 = sbr.rel (0) target = $region17
  $region16: #{actor_forward.1} parent=0 // pred_region
    _
  $region17: #{actor_forward.1} parent=0 // pred_fallthru
    _
  // Predicated region
  $region18: #{actor_forward.1} parent=0 // pred_check
    _
  $region19: #{actor_forward.1} parent=0 // pred_check_branch
    %1129 = sbr.rel (0) target = $region21
  $region20: #{actor_forward.1} parent=0 // pred_region
    _
  $region21: #{actor_forward.1} parent=0 // pred_fallthru
    _

</llo_original>
